<compile_context>
chip_gen: v6e
topology: v6e:2x2x1
jax: 0.10.0
libtpu: 0.0.40
codegen_flags: <defaults>
</compile_context>

<pallas_src>
import jax
import jax.numpy as jnp
from jax import lax
from jax.experimental import pallas as pl
from jax.experimental.pallas import tpu as pltpu


def _make_moveaxis_kernel(nb):
    def kernel(x_ref, o_ref):
        # x_ref block: (nb, c, hw)   o_ref block: (nb, hw, c)
        def body(i, carry):
            # Per-batch 2-D transpose keeps vreg pressure bounded (~32 vregs for
            # a 128x128 f32 tile) rather than one huge monolithic transpose.
            o_ref[i] = x_ref[i].T
            return carry

        lax.fori_loop(0, nb, body, 0, unroll=True)

    return kernel


# ~2 MiB per pipeline buffer; 2 in + 2 out buffers => <= ~8 MiB VMEM, safe on
# v5e (16 MiB scoped default), v6e (32 MiB scoped / 128 MiB phys) and
# v7x (32 MiB scoped / 64 MiB phys) without touching vmem_limit_bytes.
_TARGET_BLOCK_BYTES = 2 * 1024 * 1024


def _choose_nb(batch, per_batch_bytes):
    """Largest divisor of `batch` whose block stays under the per-buffer target."""
    nb = 1
    for d in range(1, batch + 1):
        if batch % d == 0 and d * per_batch_bytes <= _TARGET_BLOCK_BYTES:
            nb = d
    return nb


def move_axis_2_to_4(x):
    assert x.ndim == 5, "Move_Axis.forward implies an input with >= 5 dims"
    b0, b1, c, h, w = x.shape
    batch = b0 * b1
    hw = h * w

    # contiguous-dim merge only (no data movement)
    x2 = x.reshape(batch, c, hw)

    per_batch_bytes = c * hw * x.dtype.itemsize
    nb = _choose_nb(batch, per_batch_bytes)
    grid = batch // nb

    out2 = pl.pallas_call(
        _make_moveaxis_kernel(nb),
        out_shape=jax.ShapeDtypeStruct((batch, hw, c), x.dtype),
        grid_spec=pltpu.PrefetchScalarGridSpec(
            num_scalar_prefetch=0,
            grid=(grid,),
            in_specs=[pl.BlockSpec((nb, c, hw), lambda b: (b, 0, 0))],
            out_specs=pl.BlockSpec((nb, hw, c), lambda b: (b, 0, 0)),
        ),
        compiler_params=pltpu.CompilerParams(
            dimension_semantics=("parallel",)),
        cost_estimate=pl.CostEstimate(
            flops=0,
            transcendentals=0,
            bytes_accessed=2 * batch * per_batch_bytes),
    )(x2)

    # contiguous-dim split only (no data movement)
    return out2.reshape(b0, b1, h, w, c)


if __name__ == "__main__":
    key = jax.random.PRNGKey(0)
    # (B0, B1, C, H, W); moved axis C = 128 and H*W = 8*16 = 128, so both the
    # (C, HW) source tile and the transposed (HW, C) tile are (8,128)-aligned
    # and the output stores are lane-dense.  Total in+out = 384 KiB, so the
    # wrapper collapses to a single grid step with the whole array resident.
    x = jax.random.normal(key, (2, 3, 128, 8, 16), dtype=jnp.float32)

    out = jax.jit(move_axis_2_to_4)(x)
    out = jax.block_until_ready(out)

    ref = jnp.moveaxis(x, 2, 4)
    assert out.shape == ref.shape == (2, 3, 8, 16, 128), (out.shape, ref.shape)
    assert jnp.array_equal(out, ref), "Pallas moveaxis result mismatch"
    print("KERNEL_OK")
</pallas_src>

<mosaic_0001>
module attributes {stable_mosaic.version = 11 : i64} {
  func.func @kernel(%arg0: i32, %arg1: memref<6x128x128xf32, #tpu.memory_space<vmem>>, %arg2: memref<6x128x128xf32, #tpu.memory_space<vmem>>) attributes {dimension_semantics = [#tpu.dimension_semantics<parallel>], iteration_bounds = array<i64: 1>, scalar_prefetch = 0 : i64, scratch_operands = 0 : i64, tpu.core_type = #tpu.core_type<tc>, window_params = [{transform_indices = @transform_0, window_bounds = array<i64: 6, 128, 128>}, {transform_indices = @transform_1, window_bounds = array<i64: 6, 128, 128>}]} {
    %c0_i32 = arith.constant 0 : i32
    %0 = arith.index_cast %c0_i32 : i32 to index
    %c0 = arith.constant 0 : index
    %c0_0 = arith.constant 0 : index
    %1 = vector.load %arg1[%0, %c0, %c0_0] : memref<6x128x128xf32, #tpu.memory_space<vmem>>, vector<1x128x128xf32>
    %2 = vector.shape_cast %1 : vector<1x128x128xf32> to vector<128x128xf32>
    %3 = tpu.transpose %2, [1, 0] : vector<128x128xf32> -> vector<128x128xf32>
    %4 = arith.index_cast %c0_i32 : i32 to index
    %c0_1 = arith.constant 0 : index
    %c0_2 = arith.constant 0 : index
    %5 = vector.load %arg2[%4, %c0_1, %c0_2] : memref<6x128x128xf32, #tpu.memory_space<vmem>>, vector<1x128x128xf32>
    %6 = vector.shape_cast %5 : vector<1x128x128xf32> to vector<128x128xf32>
    %7 = vector.shape_cast %3 : vector<128x128xf32> to vector<1x128x128xf32>
    tpu.vector_store %arg2[%4, %c0_1, %c0_2], %7 {strides = array<i32>} : memref<6x128x128xf32, #tpu.memory_space<vmem>>, vector<1x128x128xf32>,
    %c1_i32 = arith.constant 1 : i32
    %8 = arith.index_cast %c1_i32 : i32 to index
    %c0_3 = arith.constant 0 : index
    %c0_4 = arith.constant 0 : index
    %9 = vector.load %arg1[%8, %c0_3, %c0_4] : memref<6x128x128xf32, #tpu.memory_space<vmem>>, vector<1x128x128xf32>
    %10 = vector.shape_cast %9 : vector<1x128x128xf32> to vector<128x128xf32>
    %11 = tpu.transpose %10, [1, 0] : vector<128x128xf32> -> vector<128x128xf32>
    %12 = arith.index_cast %c1_i32 : i32 to index
    %c0_5 = arith.constant 0 : index
    %c0_6 = arith.constant 0 : index
    %13 = vector.load %arg2[%12, %c0_5, %c0_6] : memref<6x128x128xf32, #tpu.memory_space<vmem>>, vector<1x128x128xf32>
    %14 = vector.shape_cast %13 : vector<1x128x128xf32> to vector<128x128xf32>
    %15 = vector.shape_cast %11 : vector<128x128xf32> to vector<1x128x128xf32>
    tpu.vector_store %arg2[%12, %c0_5, %c0_6], %15 {strides = array<i32>} : memref<6x128x128xf32, #tpu.memory_space<vmem>>, vector<1x128x128xf32>,
    %c2_i32 = arith.constant 2 : i32
    %16 = arith.index_cast %c2_i32 : i32 to index
    %c0_7 = arith.constant 0 : index
    %c0_8 = arith.constant 0 : index
    %17 = vector.load %arg1[%16, %c0_7, %c0_8] : memref<6x128x128xf32, #tpu.memory_space<vmem>>, vector<1x128x128xf32>
    %18 = vector.shape_cast %17 : vector<1x128x128xf32> to vector<128x128xf32>
    %19 = tpu.transpose %18, [1, 0] : vector<128x128xf32> -> vector<128x128xf32>
    %20 = arith.index_cast %c2_i32 : i32 to index
    %c0_9 = arith.constant 0 : index
    %c0_10 = arith.constant 0 : index
    %21 = vector.load %arg2[%20, %c0_9, %c0_10] : memref<6x128x128xf32, #tpu.memory_space<vmem>>, vector<1x128x128xf32>
    %22 = vector.shape_cast %21 : vector<1x128x128xf32> to vector<128x128xf32>
    %23 = vector.shape_cast %19 : vector<128x128xf32> to vector<1x128x128xf32>
    tpu.vector_store %arg2[%20, %c0_9, %c0_10], %23 {strides = array<i32>} : memref<6x128x128xf32, #tpu.memory_space<vmem>>, vector<1x128x128xf32>,
    %c3_i32 = arith.constant 3 : i32
    %24 = arith.index_cast %c3_i32 : i32 to index
    %c0_11 = arith.constant 0 : index
    %c0_12 = arith.constant 0 : index
    %25 = vector.load %arg1[%24, %c0_11, %c0_12] : memref<6x128x128xf32, #tpu.memory_space<vmem>>, vector<1x128x128xf32>
    %26 = vector.shape_cast %25 : vector<1x128x128xf32> to vector<128x128xf32>
    %27 = tpu.transpose %26, [1, 0] : vector<128x128xf32> -> vector<128x128xf32>
    %28 = arith.index_cast %c3_i32 : i32 to index
    %c0_13 = arith.constant 0 : index
    %c0_14 = arith.constant 0 : index
    %29 = vector.load %arg2[%28, %c0_13, %c0_14] : memref<6x128x128xf32, #tpu.memory_space<vmem>>, vector<1x128x128xf32>
    %30 = vector.shape_cast %29 : vector<1x128x128xf32> to vector<128x128xf32>
    %31 = vector.shape_cast %27 : vector<128x128xf32> to vector<1x128x128xf32>
    tpu.vector_store %arg2[%28, %c0_13, %c0_14], %31 {strides = array<i32>} : memref<6x128x128xf32, #tpu.memory_space<vmem>>, vector<1x128x128xf32>,
    %c4_i32 = arith.constant 4 : i32
    %32 = arith.index_cast %c4_i32 : i32 to index
    %c0_15 = arith.constant 0 : index
    %c0_16 = arith.constant 0 : index
    %33 = vector.load %arg1[%32, %c0_15, %c0_16] : memref<6x128x128xf32, #tpu.memory_space<vmem>>, vector<1x128x128xf32>
    %34 = vector.shape_cast %33 : vector<1x128x128xf32> to vector<128x128xf32>
    %35 = tpu.transpose %34, [1, 0] : vector<128x128xf32> -> vector<128x128xf32>
    %36 = arith.index_cast %c4_i32 : i32 to index
    %c0_17 = arith.constant 0 : index
    %c0_18 = arith.constant 0 : index
    %37 = vector.load %arg2[%36, %c0_17, %c0_18] : memref<6x128x128xf32, #tpu.memory_space<vmem>>, vector<1x128x128xf32>
    %38 = vector.shape_cast %37 : vector<1x128x128xf32> to vector<128x128xf32>
    %39 = vector.shape_cast %35 : vector<128x128xf32> to vector<1x128x128xf32>
    tpu.vector_store %arg2[%36, %c0_17, %c0_18], %39 {strides = array<i32>} : memref<6x128x128xf32, #tpu.memory_space<vmem>>, vector<1x128x128xf32>,
    %c5_i32 = arith.constant 5 : i32
    %40 = arith.index_cast %c5_i32 : i32 to index
    %c0_19 = arith.constant 0 : index
    %c0_20 = arith.constant 0 : index
    %41 = vector.load %arg1[%40, %c0_19, %c0_20] : memref<6x128x128xf32, #tpu.memory_space<vmem>>, vector<1x128x128xf32>
    %42 = vector.shape_cast %41 : vector<1x128x128xf32> to vector<128x128xf32>
    %43 = tpu.transpose %42, [1, 0] : vector<128x128xf32> -> vector<128x128xf32>
    %44 = arith.index_cast %c5_i32 : i32 to index
    %c0_21 = arith.constant 0 : index
    %c0_22 = arith.constant 0 : index
    %45 = vector.load %arg2[%44, %c0_21, %c0_22] : memref<6x128x128xf32, #tpu.memory_space<vmem>>, vector<1x128x128xf32>
    %46 = vector.shape_cast %45 : vector<1x128x128xf32> to vector<128x128xf32>
    %47 = vector.shape_cast %43 : vector<128x128xf32> to vector<1x128x128xf32>
    tpu.vector_store %arg2[%44, %c0_21, %c0_22], %47 {strides = array<i32>} : memref<6x128x128xf32, #tpu.memory_space<vmem>>, vector<1x128x128xf32>,
    %c6_i32 = arith.constant 6 : i32
    return
  }
  func.func @transform_0(%arg0: i32) -> (i32, i32, i32) {
    %c0_i32 = arith.constant 0 : i32
    %c0_i32_0 = arith.constant 0 : i32
    %c0_i32_1 = arith.constant 0 : i32
    return %arg0, %c0_i32, %c0_i32_0 : i32, i32, i32
  }
  func.func @transform_1(%arg0: i32) -> (i32, i32, i32) {
    %c0_i32 = arith.constant 0 : i32
    %c0_i32_0 = arith.constant 0 : i32
    %c0_i32_1 = arith.constant 0 : i32
    return %arg0, %c0_i32, %c0_i32_0 : i32, i32, i32
  }
}

</mosaic_0001>

<llo_original>
// kernel: move_axis_2_to_4.1
$region0: #{move_axis_2_to_4.1}
  #allocation0 [shape = 'u32[]', space=smem, size = 0x4, offset = 0x4, fixed_abs, tag = 'smem constant byte address 0x4 - core index']
  #allocation1 [shape = 'u32[144,128]{1,0:T(1,128)}', space=vmem, size = 0x12000, scoped, tag = 'internal scratch']
  %s0 = inlined_call_operand.vmem [shape: f32[6,128,128], index: 0, kind: input, shape index: {}]
  %s1 = inlined_call_operand.hbm [shape: f32[6,128,128], index: 1, kind: output, shape index: {}]
  %s2 = sld [smem:[#allocation0]]
  $region14: #{move_axis_2_to_4.1} parent=0
    _
  %s4 = ssub.s32 1, %s2
  %s5 = scalar_select 0, %s4, %s2
  $region1: #{move_axis_2_to_4.1} parent=0
    #allocation2 [shape = 'u8[393216]{0}', space=vmem, size = 0x60000, scoped, tag = 'output window, operand 0, single buffered']
    #allocation3 [shape = 's32[1]{0}', space=sflag, size = 0x4, scoped, tag = 'scoped memory for move_axis_2_to_4.1']
    %6 = vsyncpa [#allocation3], 0
    // Predicated region
    $region2: #{move_axis_2_to_4.1} parent=1 // pred_check
      _
    $region3: #{move_axis_2_to_4.1} parent=1 // pred_check_branch
      %8 = sbr.rel (0) target = $region5
    $region4: #{move_axis_2_to_4.1} parent=1 // pred_region
      _
    $region5: #{move_axis_2_to_4.1} parent=1 // pred_fallthru
      _
    %v9 = vld [vmem:[%s0] sm:$0xff]
    %v10 = vld [vmem:[%s0 + $0x8] sm:$0xff]
    %v11 = vld [vmem:[%s0 + $0x10] sm:$0xff]
    %v12 = vld [vmem:[%s0 + $0x18] sm:$0xff]
    %v13 = vld [vmem:[%s0 + $0x20] sm:$0xff]
    %v14 = vld [vmem:[%s0 + $0x28] sm:$0xff]
    %v15 = vld [vmem:[%s0 + $0x30] sm:$0xff]
    %v16 = vld [vmem:[%s0 + $0x38] sm:$0xff]
    %v17 = vld [vmem:[%s0 + $0x40] sm:$0xff]
    %v18 = vld [vmem:[%s0 + $0x48] sm:$0xff]
    %v19 = vld [vmem:[%s0 + $0x50] sm:$0xff]
    %v20 = vld [vmem:[%s0 + $0x58] sm:$0xff]
    %v21 = vld [vmem:[%s0 + $0x60] sm:$0xff]
    %v22 = vld [vmem:[%s0 + $0x68] sm:$0xff]
    %v23 = vld [vmem:[%s0 + $0x70] sm:$0xff]
    %v24 = vld [vmem:[%s0 + $0x78] sm:$0xff]
    %25 = vxpose.xlu0.b32.start [1/16] %v9, 128
    %26 = vxpose.xlu0.b32.cont [2/16] %v10, 128
    %27 = vxpose.xlu0.b32.cont [3/16] %v11, 128
    %28 = vxpose.xlu0.b32.cont [4/16] %v12, 128
    %29 = vxpose.xlu0.b32.cont [5/16] %v13, 128
    %30 = vxpose.xlu0.b32.cont [6/16] %v14, 128
    %31 = vxpose.xlu0.b32.cont [7/16] %v15, 128
    %32 = vxpose.xlu0.b32.cont [8/16] %v16, 128
    %33 = vxpose.xlu0.b32.cont [9/16] %v17, 128
    %34 = vxpose.xlu0.b32.cont [10/16] %v18, 128
    %35 = vxpose.xlu0.b32.cont [11/16] %v19, 128
    %36 = vxpose.xlu0.b32.cont [12/16] %v20, 128
    %37 = vxpose.xlu0.b32.cont [13/16] %v21, 128
    %38 = vxpose.xlu0.b32.cont [14/16] %v22, 128
    %39 = vxpose.xlu0.b32.cont [15/16] %v23, 128
    %40 = vxpose.xlu0.b32.end [16/16] %v24, 128
    %v41 = vpop.trf.xlu0
    %v42 = vpop.trf.xlu0
    %v43 = vpop.trf.xlu0
    %v44 = vpop.trf.xlu0
    %v45 = vpop.trf.xlu0
    %v46 = vpop.trf.xlu0
    %v47 = vpop.trf.xlu0
    %v48 = vpop.trf.xlu0
    %v49 = vpop.trf.xlu0
    %v50 = vpop.trf.xlu0
    %v51 = vpop.trf.xlu0
    %v52 = vpop.trf.xlu0
    %v53 = vpop.trf.xlu0
    %v54 = vpop.trf.xlu0
    %v55 = vpop.trf.xlu0
    %v56 = vpop.trf.xlu0
    %57 = vst [vmem:[#allocation2] sm:$0xff] %v41
    %58 = vst [vmem:[#allocation2 + $0x8] sm:$0xff] %v42
    %59 = vst [vmem:[#allocation2 + $0x10] sm:$0xff] %v43
    %60 = vst [vmem:[#allocation2 + $0x18] sm:$0xff] %v44
    %61 = vst [vmem:[#allocation2 + $0x20] sm:$0xff] %v45
    %62 = vst [vmem:[#allocation2 + $0x28] sm:$0xff] %v46
    %63 = vst [vmem:[#allocation2 + $0x30] sm:$0xff] %v47
    %64 = vst [vmem:[#allocation2 + $0x38] sm:$0xff] %v48
    %65 = vst [vmem:[#allocation2 + $0x40] sm:$0xff] %v49
    %66 = vst [vmem:[#allocation2 + $0x48] sm:$0xff] %v50
    %67 = vst [vmem:[#allocation2 + $0x50] sm:$0xff] %v51
    %68 = vst [vmem:[#allocation2 + $0x58] sm:$0xff] %v52
    %69 = vst [vmem:[#allocation2 + $0x60] sm:$0xff] %v53
    %70 = vst [vmem:[#allocation2 + $0x68] sm:$0xff] %v54
    %71 = vst [vmem:[#allocation2 + $0x70] sm:$0xff] %v55
    %72 = vst [vmem:[#allocation2 + $0x78] sm:$0xff] %v56
    %s73 = scalar_lea.vmem %s0, 128
    %v74 = vld [vmem:[%s73] sm:$0xff]
    %v75 = vld [vmem:[%s73 + $0x8] sm:$0xff]
    %v76 = vld [vmem:[%s73 + $0x10] sm:$0xff]
    %v77 = vld [vmem:[%s73 + $0x18] sm:$0xff]
    %v78 = vld [vmem:[%s73 + $0x20] sm:$0xff]
    %v79 = vld [vmem:[%s73 + $0x28] sm:$0xff]
    %v80 = vld [vmem:[%s73 + $0x30] sm:$0xff]
    %v81 = vld [vmem:[%s73 + $0x38] sm:$0xff]
    %v82 = vld [vmem:[%s73 + $0x40] sm:$0xff]
    %v83 = vld [vmem:[%s73 + $0x48] sm:$0xff]
    %v84 = vld [vmem:[%s73 + $0x50] sm:$0xff]
    %v85 = vld [vmem:[%s73 + $0x58] sm:$0xff]
    %v86 = vld [vmem:[%s73 + $0x60] sm:$0xff]
    %v87 = vld [vmem:[%s73 + $0x68] sm:$0xff]
    %v88 = vld [vmem:[%s73 + $0x70] sm:$0xff]
    %v89 = vld [vmem:[%s73 + $0x78] sm:$0xff]
    %90 = vxpose.xlu0.b32.start [1/16] %v74, 128
    %91 = vxpose.xlu0.b32.cont [2/16] %v75, 128
    %92 = vxpose.xlu0.b32.cont [3/16] %v76, 128
    %93 = vxpose.xlu0.b32.cont [4/16] %v77, 128
    %94 = vxpose.xlu0.b32.cont [5/16] %v78, 128
    %95 = vxpose.xlu0.b32.cont [6/16] %v79, 128
    %96 = vxpose.xlu0.b32.cont [7/16] %v80, 128
    %97 = vxpose.xlu0.b32.cont [8/16] %v81, 128
    %98 = vxpose.xlu0.b32.cont [9/16] %v82, 128
    %99 = vxpose.xlu0.b32.cont [10/16] %v83, 128
    %100 = vxpose.xlu0.b32.cont [11/16] %v84, 128
    %101 = vxpose.xlu0.b32.cont [12/16] %v85, 128
    %102 = vxpose.xlu0.b32.cont [13/16] %v86, 128
    %103 = vxpose.xlu0.b32.cont [14/16] %v87, 128
    %104 = vxpose.xlu0.b32.cont [15/16] %v88, 128
    %105 = vxpose.xlu0.b32.end [16/16] %v89, 128
    %v106 = vpop.trf.xlu0
    %v107 = vpop.trf.xlu0
    %v108 = vpop.trf.xlu0
    %v109 = vpop.trf.xlu0
    %v110 = vpop.trf.xlu0
    %v111 = vpop.trf.xlu0
    %v112 = vpop.trf.xlu0
    %v113 = vpop.trf.xlu0
    %v114 = vpop.trf.xlu0
    %v115 = vpop.trf.xlu0
    %v116 = vpop.trf.xlu0
    %v117 = vpop.trf.xlu0
    %v118 = vpop.trf.xlu0
    %v119 = vpop.trf.xlu0
    %v120 = vpop.trf.xlu0
    %v121 = vpop.trf.xlu0
    %s122 = scalar_lea.vmem [#allocation2], 128
    %123 = vst [vmem:[%s122] sm:$0xff] %v106
    %124 = vst [vmem:[%s122 + $0x8] sm:$0xff] %v107
    %125 = vst [vmem:[%s122 + $0x10] sm:$0xff] %v108
    %126 = vst [vmem:[%s122 + $0x18] sm:$0xff] %v109
    %127 = vst [vmem:[%s122 + $0x20] sm:$0xff] %v110
    %128 = vst [vmem:[%s122 + $0x28] sm:$0xff] %v111
    %129 = vst [vmem:[%s122 + $0x30] sm:$0xff] %v112
    %130 = vst [vmem:[%s122 + $0x38] sm:$0xff] %v113
    %131 = vst [vmem:[%s122 + $0x40] sm:$0xff] %v114
    %132 = vst [vmem:[%s122 + $0x48] sm:$0xff] %v115
    %133 = vst [vmem:[%s122 + $0x50] sm:$0xff] %v116
    %134 = vst [vmem:[%s122 + $0x58] sm:$0xff] %v117
    %135 = vst [vmem:[%s122 + $0x60] sm:$0xff] %v118
    %136 = vst [vmem:[%s122 + $0x68] sm:$0xff] %v119
    %137 = vst [vmem:[%s122 + $0x70] sm:$0xff] %v120
    %138 = vst [vmem:[%s122 + $0x78] sm:$0xff] %v121
    %s139 = scalar_lea.vmem %s0, 256
    %v140 = vld [vmem:[%s139] sm:$0xff]
    %v141 = vld [vmem:[%s139 + $0x8] sm:$0xff]
    %v142 = vld [vmem:[%s139 + $0x10] sm:$0xff]
    %v143 = vld [vmem:[%s139 + $0x18] sm:$0xff]
    %v144 = vld [vmem:[%s139 + $0x20] sm:$0xff]
    %v145 = vld [vmem:[%s139 + $0x28] sm:$0xff]
    %v146 = vld [vmem:[%s139 + $0x30] sm:$0xff]
    %v147 = vld [vmem:[%s139 + $0x38] sm:$0xff]
    %v148 = vld [vmem:[%s139 + $0x40] sm:$0xff]
    %v149 = vld [vmem:[%s139 + $0x48] sm:$0xff]
    %v150 = vld [vmem:[%s139 + $0x50] sm:$0xff]
    %v151 = vld [vmem:[%s139 + $0x58] sm:$0xff]
    %v152 = vld [vmem:[%s139 + $0x60] sm:$0xff]
    %v153 = vld [vmem:[%s139 + $0x68] sm:$0xff]
    %v154 = vld [vmem:[%s139 + $0x70] sm:$0xff]
    %v155 = vld [vmem:[%s139 + $0x78] sm:$0xff]
    %156 = vxpose.xlu0.b32.start [1/16] %v140, 128
    %157 = vxpose.xlu0.b32.cont [2/16] %v141, 128
    %158 = vxpose.xlu0.b32.cont [3/16] %v142, 128
    %159 = vxpose.xlu0.b32.cont [4/16] %v143, 128
    %160 = vxpose.xlu0.b32.cont [5/16] %v144, 128
    %161 = vxpose.xlu0.b32.cont [6/16] %v145, 128
    %162 = vxpose.xlu0.b32.cont [7/16] %v146, 128
    %163 = vxpose.xlu0.b32.cont [8/16] %v147, 128
    %164 = vxpose.xlu0.b32.cont [9/16] %v148, 128
    %165 = vxpose.xlu0.b32.cont [10/16] %v149, 128
    %166 = vxpose.xlu0.b32.cont [11/16] %v150, 128
    %167 = vxpose.xlu0.b32.cont [12/16] %v151, 128
    %168 = vxpose.xlu0.b32.cont [13/16] %v152, 128
    %169 = vxpose.xlu0.b32.cont [14/16] %v153, 128
    %170 = vxpose.xlu0.b32.cont [15/16] %v154, 128
    %171 = vxpose.xlu0.b32.end [16/16] %v155, 128
    %v172 = vpop.trf.xlu0
    %v173 = vpop.trf.xlu0
    %v174 = vpop.trf.xlu0
    %v175 = vpop.trf.xlu0
    %v176 = vpop.trf.xlu0
    %v177 = vpop.trf.xlu0
    %v178 = vpop.trf.xlu0
    %v179 = vpop.trf.xlu0
    %v180 = vpop.trf.xlu0
    %v181 = vpop.trf.xlu0
    %v182 = vpop.trf.xlu0
    %v183 = vpop.trf.xlu0
    %v184 = vpop.trf.xlu0
    %v185 = vpop.trf.xlu0
    %v186 = vpop.trf.xlu0
    %v187 = vpop.trf.xlu0
    %s188 = scalar_lea.vmem [#allocation2], 256
    %189 = vst [vmem:[%s188] sm:$0xff] %v172
    %190 = vst [vmem:[%s188 + $0x8] sm:$0xff] %v173
    %191 = vst [vmem:[%s188 + $0x10] sm:$0xff] %v174
    %192 = vst [vmem:[%s188 + $0x18] sm:$0xff] %v175
    %193 = vst [vmem:[%s188 + $0x20] sm:$0xff] %v176
    %194 = vst [vmem:[%s188 + $0x28] sm:$0xff] %v177
    %195 = vst [vmem:[%s188 + $0x30] sm:$0xff] %v178
    %196 = vst [vmem:[%s188 + $0x38] sm:$0xff] %v179
    %197 = vst [vmem:[%s188 + $0x40] sm:$0xff] %v180
    %198 = vst [vmem:[%s188 + $0x48] sm:$0xff] %v181
    %199 = vst [vmem:[%s188 + $0x50] sm:$0xff] %v182
    %200 = vst [vmem:[%s188 + $0x58] sm:$0xff] %v183
    %201 = vst [vmem:[%s188 + $0x60] sm:$0xff] %v184
    %202 = vst [vmem:[%s188 + $0x68] sm:$0xff] %v185
    %203 = vst [vmem:[%s188 + $0x70] sm:$0xff] %v186
    %204 = vst [vmem:[%s188 + $0x78] sm:$0xff] %v187
    %s205 = scalar_lea.vmem %s0, 384
    %v206 = vld [vmem:[%s205] sm:$0xff]
    %v207 = vld [vmem:[%s205 + $0x8] sm:$0xff]
    %v208 = vld [vmem:[%s205 + $0x10] sm:$0xff]
    %v209 = vld [vmem:[%s205 + $0x18] sm:$0xff]
    %v210 = vld [vmem:[%s205 + $0x20] sm:$0xff]
    %v211 = vld [vmem:[%s205 + $0x28] sm:$0xff]
    %v212 = vld [vmem:[%s205 + $0x30] sm:$0xff]
    %v213 = vld [vmem:[%s205 + $0x38] sm:$0xff]
    %v214 = vld [vmem:[%s205 + $0x40] sm:$0xff]
    %v215 = vld [vmem:[%s205 + $0x48] sm:$0xff]
    %v216 = vld [vmem:[%s205 + $0x50] sm:$0xff]
    %v217 = vld [vmem:[%s205 + $0x58] sm:$0xff]
    %v218 = vld [vmem:[%s205 + $0x60] sm:$0xff]
    %v219 = vld [vmem:[%s205 + $0x68] sm:$0xff]
    %v220 = vld [vmem:[%s205 + $0x70] sm:$0xff]
    %v221 = vld [vmem:[%s205 + $0x78] sm:$0xff]
    %222 = vxpose.xlu0.b32.start [1/16] %v206, 128
    %223 = vxpose.xlu0.b32.cont [2/16] %v207, 128
    %224 = vxpose.xlu0.b32.cont [3/16] %v208, 128
    %225 = vxpose.xlu0.b32.cont [4/16] %v209, 128
    %226 = vxpose.xlu0.b32.cont [5/16] %v210, 128
    %227 = vxpose.xlu0.b32.cont [6/16] %v211, 128
    %228 = vxpose.xlu0.b32.cont [7/16] %v212, 128
    %229 = vxpose.xlu0.b32.cont [8/16] %v213, 128
    %230 = vxpose.xlu0.b32.cont [9/16] %v214, 128
    %231 = vxpose.xlu0.b32.cont [10/16] %v215, 128
    %232 = vxpose.xlu0.b32.cont [11/16] %v216, 128
    %233 = vxpose.xlu0.b32.cont [12/16] %v217, 128
    %234 = vxpose.xlu0.b32.cont [13/16] %v218, 128
    %235 = vxpose.xlu0.b32.cont [14/16] %v219, 128
    %236 = vxpose.xlu0.b32.cont [15/16] %v220, 128
    %237 = vxpose.xlu0.b32.end [16/16] %v221, 128
    %v238 = vpop.trf.xlu0
    %v239 = vpop.trf.xlu0
    %v240 = vpop.trf.xlu0
    %v241 = vpop.trf.xlu0
    %v242 = vpop.trf.xlu0
    %v243 = vpop.trf.xlu0
    %v244 = vpop.trf.xlu0
    %v245 = vpop.trf.xlu0
    %v246 = vpop.trf.xlu0
    %v247 = vpop.trf.xlu0
    %v248 = vpop.trf.xlu0
    %v249 = vpop.trf.xlu0
    %v250 = vpop.trf.xlu0
    %v251 = vpop.trf.xlu0
    %v252 = vpop.trf.xlu0
    %v253 = vpop.trf.xlu0
    %s254 = scalar_lea.vmem [#allocation2], 384
    %255 = vst [vmem:[%s254] sm:$0xff] %v238
    %256 = vst [vmem:[%s254 + $0x8] sm:$0xff] %v239
    %257 = vst [vmem:[%s254 + $0x10] sm:$0xff] %v240
    %258 = vst [vmem:[%s254 + $0x18] sm:$0xff] %v241
    %259 = vst [vmem:[%s254 + $0x20] sm:$0xff] %v242
    %260 = vst [vmem:[%s254 + $0x28] sm:$0xff] %v243
    %261 = vst [vmem:[%s254 + $0x30] sm:$0xff] %v244
    %262 = vst [vmem:[%s254 + $0x38] sm:$0xff] %v245
    %263 = vst [vmem:[%s254 + $0x40] sm:$0xff] %v246
    %264 = vst [vmem:[%s254 + $0x48] sm:$0xff] %v247
    %265 = vst [vmem:[%s254 + $0x50] sm:$0xff] %v248
    %266 = vst [vmem:[%s254 + $0x58] sm:$0xff] %v249
    %267 = vst [vmem:[%s254 + $0x60] sm:$0xff] %v250
    %268 = vst [vmem:[%s254 + $0x68] sm:$0xff] %v251
    %269 = vst [vmem:[%s254 + $0x70] sm:$0xff] %v252
    %270 = vst [vmem:[%s254 + $0x78] sm:$0xff] %v253
    %s271 = scalar_lea.vmem %s0, 512
    %v272 = vld [vmem:[%s271] sm:$0xff]
    %v273 = vld [vmem:[%s271 + $0x8] sm:$0xff]
    %v274 = vld [vmem:[%s271 + $0x10] sm:$0xff]
    %v275 = vld [vmem:[%s271 + $0x18] sm:$0xff]
    %v276 = vld [vmem:[%s271 + $0x20] sm:$0xff]
    %v277 = vld [vmem:[%s271 + $0x28] sm:$0xff]
    %v278 = vld [vmem:[%s271 + $0x30] sm:$0xff]
    %v279 = vld [vmem:[%s271 + $0x38] sm:$0xff]
    %v280 = vld [vmem:[%s271 + $0x40] sm:$0xff]
    %v281 = vld [vmem:[%s271 + $0x48] sm:$0xff]
    %v282 = vld [vmem:[%s271 + $0x50] sm:$0xff]
    %v283 = vld [vmem:[%s271 + $0x58] sm:$0xff]
    %v284 = vld [vmem:[%s271 + $0x60] sm:$0xff]
    %v285 = vld [vmem:[%s271 + $0x68] sm:$0xff]
    %v286 = vld [vmem:[%s271 + $0x70] sm:$0xff]
    %v287 = vld [vmem:[%s271 + $0x78] sm:$0xff]
    %288 = vxpose.xlu0.b32.start [1/16] %v272, 128
    %289 = vxpose.xlu0.b32.cont [2/16] %v273, 128
    %290 = vxpose.xlu0.b32.cont [3/16] %v274, 128
    %291 = vxpose.xlu0.b32.cont [4/16] %v275, 128
    %292 = vxpose.xlu0.b32.cont [5/16] %v276, 128
    %293 = vxpose.xlu0.b32.cont [6/16] %v277, 128
    %294 = vxpose.xlu0.b32.cont [7/16] %v278, 128
    %295 = vxpose.xlu0.b32.cont [8/16] %v279, 128
    %296 = vxpose.xlu0.b32.cont [9/16] %v280, 128
    %297 = vxpose.xlu0.b32.cont [10/16] %v281, 128
    %298 = vxpose.xlu0.b32.cont [11/16] %v282, 128
    %299 = vxpose.xlu0.b32.cont [12/16] %v283, 128
    %300 = vxpose.xlu0.b32.cont [13/16] %v284, 128
    %301 = vxpose.xlu0.b32.cont [14/16] %v285, 128
    %302 = vxpose.xlu0.b32.cont [15/16] %v286, 128
    %303 = vxpose.xlu0.b32.end [16/16] %v287, 128
    %v304 = vpop.trf.xlu0
    %v305 = vpop.trf.xlu0
    %v306 = vpop.trf.xlu0
    %v307 = vpop.trf.xlu0
    %v308 = vpop.trf.xlu0
    %v309 = vpop.trf.xlu0
    %v310 = vpop.trf.xlu0
    %v311 = vpop.trf.xlu0
    %v312 = vpop.trf.xlu0
    %v313 = vpop.trf.xlu0
    %v314 = vpop.trf.xlu0
    %v315 = vpop.trf.xlu0
    %v316 = vpop.trf.xlu0
    %v317 = vpop.trf.xlu0
    %v318 = vpop.trf.xlu0
    %v319 = vpop.trf.xlu0
    %s320 = scalar_lea.vmem [#allocation2], 512
    %321 = vst [vmem:[%s320] sm:$0xff] %v304
    %322 = vst [vmem:[%s320 + $0x8] sm:$0xff] %v305
    %323 = vst [vmem:[%s320 + $0x10] sm:$0xff] %v306
    %324 = vst [vmem:[%s320 + $0x18] sm:$0xff] %v307
    %325 = vst [vmem:[%s320 + $0x20] sm:$0xff] %v308
    %326 = vst [vmem:[%s320 + $0x28] sm:$0xff] %v309
    %327 = vst [vmem:[%s320 + $0x30] sm:$0xff] %v310
    %328 = vst [vmem:[%s320 + $0x38] sm:$0xff] %v311
    %329 = vst [vmem:[%s320 + $0x40] sm:$0xff] %v312
    %330 = vst [vmem:[%s320 + $0x48] sm:$0xff] %v313
    %331 = vst [vmem:[%s320 + $0x50] sm:$0xff] %v314
    %332 = vst [vmem:[%s320 + $0x58] sm:$0xff] %v315
    %333 = vst [vmem:[%s320 + $0x60] sm:$0xff] %v316
    %334 = vst [vmem:[%s320 + $0x68] sm:$0xff] %v317
    %335 = vst [vmem:[%s320 + $0x70] sm:$0xff] %v318
    %336 = vst [vmem:[%s320 + $0x78] sm:$0xff] %v319
    %s337 = scalar_lea.vmem %s0, 640
    %v338 = vld [vmem:[%s337] sm:$0xff]
    %v339 = vld [vmem:[%s337 + $0x8] sm:$0xff]
    %v340 = vld [vmem:[%s337 + $0x10] sm:$0xff]
    %v341 = vld [vmem:[%s337 + $0x18] sm:$0xff]
    %v342 = vld [vmem:[%s337 + $0x20] sm:$0xff]
    %v343 = vld [vmem:[%s337 + $0x28] sm:$0xff]
    %v344 = vld [vmem:[%s337 + $0x30] sm:$0xff]
    %v345 = vld [vmem:[%s337 + $0x38] sm:$0xff]
    %v346 = vld [vmem:[%s337 + $0x40] sm:$0xff]
    %v347 = vld [vmem:[%s337 + $0x48] sm:$0xff]
    %v348 = vld [vmem:[%s337 + $0x50] sm:$0xff]
    %v349 = vld [vmem:[%s337 + $0x58] sm:$0xff]
    %v350 = vld [vmem:[%s337 + $0x60] sm:$0xff]
    %v351 = vld [vmem:[%s337 + $0x68] sm:$0xff]
    %v352 = vld [vmem:[%s337 + $0x70] sm:$0xff]
    %v353 = vld [vmem:[%s337 + $0x78] sm:$0xff]
    %354 = vxpose.xlu0.b32.start [1/16] %v338, 128
    %355 = vxpose.xlu0.b32.cont [2/16] %v339, 128
    %356 = vxpose.xlu0.b32.cont [3/16] %v340, 128
    %357 = vxpose.xlu0.b32.cont [4/16] %v341, 128
    %358 = vxpose.xlu0.b32.cont [5/16] %v342, 128
    %359 = vxpose.xlu0.b32.cont [6/16] %v343, 128
    %360 = vxpose.xlu0.b32.cont [7/16] %v344, 128
    %361 = vxpose.xlu0.b32.cont [8/16] %v345, 128
    %362 = vxpose.xlu0.b32.cont [9/16] %v346, 128
    %363 = vxpose.xlu0.b32.cont [10/16] %v347, 128
    %364 = vxpose.xlu0.b32.cont [11/16] %v348, 128
    %365 = vxpose.xlu0.b32.cont [12/16] %v349, 128
    %366 = vxpose.xlu0.b32.cont [13/16] %v350, 128
    %367 = vxpose.xlu0.b32.cont [14/16] %v351, 128
    %368 = vxpose.xlu0.b32.cont [15/16] %v352, 128
    %369 = vxpose.xlu0.b32.end [16/16] %v353, 128
    %v370 = vpop.trf.xlu0
    %v371 = vpop.trf.xlu0
    %v372 = vpop.trf.xlu0
    %v373 = vpop.trf.xlu0
    %v374 = vpop.trf.xlu0
    %v375 = vpop.trf.xlu0
    %v376 = vpop.trf.xlu0
    %v377 = vpop.trf.xlu0
    %v378 = vpop.trf.xlu0
    %v379 = vpop.trf.xlu0
    %v380 = vpop.trf.xlu0
    %v381 = vpop.trf.xlu0
    %v382 = vpop.trf.xlu0
    %v383 = vpop.trf.xlu0
    %v384 = vpop.trf.xlu0
    %v385 = vpop.trf.xlu0
    %s386 = scalar_lea.vmem [#allocation2], 640
    %387 = vst [vmem:[%s386] sm:$0xff] %v370
    %388 = vst [vmem:[%s386 + $0x8] sm:$0xff] %v371
    %389 = vst [vmem:[%s386 + $0x10] sm:$0xff] %v372
    %390 = vst [vmem:[%s386 + $0x18] sm:$0xff] %v373
    %391 = vst [vmem:[%s386 + $0x20] sm:$0xff] %v374
    %392 = vst [vmem:[%s386 + $0x28] sm:$0xff] %v375
    %393 = vst [vmem:[%s386 + $0x30] sm:$0xff] %v376
    %394 = vst [vmem:[%s386 + $0x38] sm:$0xff] %v377
    %395 = vst [vmem:[%s386 + $0x40] sm:$0xff] %v378
    %396 = vst [vmem:[%s386 + $0x48] sm:$0xff] %v379
    %397 = vst [vmem:[%s386 + $0x50] sm:$0xff] %v380
    %398 = vst [vmem:[%s386 + $0x58] sm:$0xff] %v381
    %399 = vst [vmem:[%s386 + $0x60] sm:$0xff] %v382
    %400 = vst [vmem:[%s386 + $0x68] sm:$0xff] %v383
    %401 = vst [vmem:[%s386 + $0x70] sm:$0xff] %v384
    %402 = vst [vmem:[%s386 + $0x78] sm:$0xff] %v385
    // Predicated region
    $region6: #{move_axis_2_to_4.1} parent=1 // pred_check
      _
    $region7: #{move_axis_2_to_4.1} parent=1 // pred_check_branch
      %404 = sbr.rel (0) target = $region9
    $region8: #{move_axis_2_to_4.1} parent=1 // pred_region
      %s406 = ssub.s32 12288, 12288
      %407 = vsyncadd [#allocation3], %s406
      %s408 = sshll.u32 [#allocation2], 4
      %s409 = int_to_ptr.vmem [resolvable:$true] %s408
      %414 = dma.vmem_to_hbm [thread:$0]  %s409, 12288, %s1, [#allocation3], 128, 128, 8
    $region9: #{move_axis_2_to_4.1} parent=1 // pred_fallthru
      _
    // Predicated region
    $region10: #{move_axis_2_to_4.1} parent=1 // pred_check
      _
    $region11: #{move_axis_2_to_4.1} parent=1 // pred_check_branch
      %416 = sbr.rel (0) target = $region13
    $region12: #{move_axis_2_to_4.1} parent=1 // pred_region
      %417 = dma.done [#allocation3], 12288
    $region13: #{move_axis_2_to_4.1} parent=1 // pred_fallthru
      _
    %418 = vsyncpa [#allocation3], 1

</llo_original>
